<compile_context>
chip_gen: v7x
topology: tpu7x:2x2x1
jax: 0.10.0
libtpu: 0.0.40
codegen_flags: <defaults>
</compile_context>

<pallas_src>
import math
import functools

import jax
import jax.numpy as jnp
from jax.experimental import pallas as pl
from jax.experimental.pallas import tpu as pltpu


# -----------------------------------------------------------------------------
# Kernels. grid = (M//tm, N//tn, K//tk); the reduction axis K is innermost and
# marked "arbitrary". The output BlockSpec maps every k to the same (i, j)
# block, so o_ref stays resident in VMEM across the whole reduction and we
# accumulate directly into it (output dtype f32, matching torch.FloatTensor).
# -----------------------------------------------------------------------------
def _linear_kernel_bias(x_ref, w_ref, b_ref, o_ref):
    k = pl.program_id(2)

    @pl.when(k == 0)
    def _():
        # Fold the bias into the accumulator init instead of a final add pass.
        o_ref[...] = jnp.broadcast_to(b_ref[...], o_ref.shape)

    o_ref[...] += jnp.dot(
        x_ref[...], w_ref[...], preferred_element_type=jnp.float32
    )


def _linear_kernel_nobias(x_ref, w_ref, o_ref):
    k = pl.program_id(2)

    @pl.when(k == 0)
    def _():
        o_ref[...] = jnp.zeros_like(o_ref)

    o_ref[...] += jnp.dot(
        x_ref[...], w_ref[...], preferred_element_type=jnp.float32
    )


# -----------------------------------------------------------------------------
# Tiling helpers.
# -----------------------------------------------------------------------------
def _round_up(x, m):
    return ((x + m - 1) // m) * m


def _vmem_capacity_bytes():
    try:
        return int(getattr(pltpu.get_tpu_info(), "vmem_capacity_bytes", 128 << 20))
    except Exception:
        # Perf-only fallback; assumes the common 128 MiB parts.
        return 128 << 20


def _pick_vmem_limit_bytes(cap):
    # ~100 MiB scoped on 128 MiB parts (v5e/v6e), ~48 MiB on 64 MiB parts (v7x).
    return (100 << 20) if cap >= (128 << 20) else (48 << 20)


def _default_tiles(M, N, K, *, in_bytes, vmem_limit):
    """Generation-aware tile selection (caps per perf review)."""
    big_vmem = vmem_limit >= (96 << 20)
    cap_m, cap_n, cap_k = (512, 1024, 2048) if big_vmem else (512, 512, 1024)

    m_align = 16 if in_bytes == 2 else 8  # bf16 packs two rows per sublane.

    tm = min(cap_m, _round_up(M, m_align))
    tn = min(cap_n, _round_up(N, 128))
    if K < 128:
        tk = K  # full-extent K block is legal by the layout rule.
    else:
        tk = min(cap_k, _round_up(K, 128))

    # Guarantee >= 2 blocks on the parallel (i, j) axes when possible so the
    # two v7x TensorCores both get work (harmless on single-TC parts).
    if pl.cdiv(M, tm) * pl.cdiv(N, tn) == 1:
        n_lanes = _round_up(N, 128) // 128
        m_rows = _round_up(M, m_align) // m_align
        if n_lanes >= 2:
            tn = 128 * ((n_lanes + 1) // 2)
        elif m_rows >= 2:
            tm = m_align * ((m_rows + 1) // 2)

    # Safety net: keep the double-buffered footprint inside the scoped budget.
    def footprint(tm_, tn_, tk_):
        return 2 * (tm_ * tk_ + tk_ * tn_) * in_bytes + 2 * tm_ * tn_ * 4

    budget = int(vmem_limit * 0.8)
    while footprint(tm, tn, tk) > budget and tk >= 256:
        tk //= 2
    while footprint(tm, tn, tk) > budget and tn >= 256:
        tn //= 2
    while footprint(tm, tn, tk) > budget and tm >= 2 * m_align:
        tm //= 2
    return tm, tn, tk


def _check_tile(name, t, dim_pad, align):
    assert t % align == 0 or t == dim_pad, (
        f"tile {name}={t} must be a multiple of {align} or equal the "
        f"(padded) dimension {dim_pad}"
    )


# -----------------------------------------------------------------------------
# Wrapper.
# -----------------------------------------------------------------------------
@functools.partial(
    jax.jit, static_argnames=("tm", "tn", "tk", "use_bf16", "w_buffers")
)
def my_linear(x, weight, bias=None, *, tm=None, tn=None, tk=None,
              use_bf16=True, w_buffers=None):
    """Pallas implementation of MyLinear.forward: x @ weight (+ bias)."""
    M, K = x.shape
    K2, N = weight.shape
    assert K == K2, "in_features mismatch"

    # Cast BEFORE padding: bf16 operands (f32 accumulation) run at MXU rate on
    # every TPU generation and halve x/W DMA + pad traffic.
    if use_bf16:
        x = x.astype(jnp.bfloat16)
        weight = weight.astype(jnp.bfloat16)
    in_bytes = jnp.dtype(x.dtype).itemsize

    cap = _vmem_capacity_bytes()
    vmem_limit = _pick_vmem_limit_bytes(cap)

    dtm, dtn, dtk = _default_tiles(M, N, K, in_bytes=in_bytes,
                                   vmem_limit=vmem_limit)
    tm = tm or dtm
    tn = tn or dtn
    tk = tk or dtk

    Mp, Np, Kp = _round_up(M, tm), _round_up(N, tn), _round_up(K, tk)
    _check_tile("tm", tm, Mp, 16 if in_bytes == 2 else 8)
    _check_tile("tn", tn, Np, 128)
    _check_tile("tk", tk, Kp, 128)

    # Only pad when a remainder actually exists; zero K-padding keeps the
    # accumulation exact.
    if (Mp, Kp) != (M, K):
        x = jnp.pad(x, ((0, Mp - M), (0, Kp - K)))
    if (Kp, Np) != (K, N):
        weight = jnp.pad(weight, ((0, Kp - K), (0, Np - N)))

    grid = (Mp // tm, Np // tn, Kp // tk)
    out_shape = jax.ShapeDtypeStruct((Mp, Np), jnp.float32)
    cparams = pltpu.CompilerParams(
        dimension_semantics=("parallel", "parallel", "arbitrary"),
        vmem_limit_bytes=vmem_limit,
    )

    x_spec = pl.BlockSpec((tm, tk), lambda i, j, k: (i, k))
    if w_buffers is None:
        w_spec = pl.BlockSpec((tk, tn), lambda i, j, k: (k, j))
    else:
        # Enable if profiling shows exposed DMA on the weight stream
        # (large K, modest tn); most relevant on v7x (smaller tiles, fast HBM).
        w_spec = pl.BlockSpec((tk, tn), lambda i, j, k: (k, j),
                              pipeline_mode=pl.Buffered(w_buffers))
    o_spec = pl.BlockSpec((tm, tn), lambda i, j, k: (i, j))

    if bias is not None:
        bias2d = bias.reshape(1, N).astype(jnp.float32)
        if Np != N:
            bias2d = jnp.pad(bias2d, ((0, 0), (0, Np - N)))
        out = pl.pallas_call(
            _linear_kernel_bias,
            out_shape=out_shape,
            grid_spec=pltpu.PrefetchScalarGridSpec(
                num_scalar_prefetch=0,
                grid=grid,
                in_specs=[
                    x_spec,
                    w_spec,
                    pl.BlockSpec((1, tn), lambda i, j, k: (0, j)),
                ],
                out_specs=o_spec,
            ),
            compiler_params=cparams,
        )(x, weight, bias2d)
    else:
        out = pl.pallas_call(
            _linear_kernel_nobias,
            out_shape=out_shape,
            grid_spec=pltpu.PrefetchScalarGridSpec(
                num_scalar_prefetch=0,
                grid=grid,
                in_specs=[x_spec, w_spec],
                out_specs=o_spec,
            ),
            compiler_params=cparams,
        )(x, weight)

    if (Mp, Np) != (M, N):
        out = out[:M, :N]
    return out


def init_my_linear_params(key, in_features, out_features, bias=True):
    """Mirror MyLinear.reset_parameters: uniform(-stdv, stdv),
    stdv = 1/sqrt(out_features)."""
    stdv = 1.0 / math.sqrt(out_features)
    kw, kb = jax.random.split(key)
    weight = jax.random.uniform(
        kw, (in_features, out_features), jnp.float32, minval=-stdv, maxval=stdv
    )
    if bias:
        b = jax.random.uniform(
            kb, (out_features,), jnp.float32, minval=-stdv, maxval=stdv
        )
    else:
        b = None
    return weight, b


if __name__ == "__main__":
    key = jax.random.PRNGKey(0)
    kx, kp = jax.random.split(key)

    batch, in_features, out_features = 8, 32, 16
    x = jax.random.normal(kx, (batch, in_features), jnp.float32)
    weight, bias = init_my_linear_params(kp, in_features, out_features, bias=True)

    ref = x @ weight + bias

    # Default fast path: bf16 operands, f32 accumulation.
    out = jax.block_until_ready(my_linear(x, weight, bias))
    assert out.shape == (batch, out_features)
    assert out.dtype == jnp.float32
    assert jnp.allclose(out, ref, atol=5e-2, rtol=5e-2), "bf16 path mismatch"

    # Full-precision path matches the f32 reference tightly.
    out_f32 = jax.block_until_ready(my_linear(x, weight, bias, use_bf16=False))
    assert jnp.allclose(out_f32, ref, atol=1e-5, rtol=1e-5), "f32 path mismatch"

    # No-bias path.
    out_nb = jax.block_until_ready(my_linear(x, weight, None, use_bf16=False))
    assert jnp.allclose(out_nb, x @ weight, atol=1e-5, rtol=1e-5), "nobias mismatch"

    # Multi-tile / remainder shapes: exercises padding, the K reduction loop,
    # and the >=2-parallel-block split.
    M2, K2_, N2 = 300, 640, 384
    kx2, kw2, kb2 = jax.random.split(key, 3)
    x2 = jax.random.normal(kx2, (M2, K2_), jnp.float32)
    w2 = jax.random.normal(kw2, (K2_, N2), jnp.float32) * 0.05
    b2 = jax.random.normal(kb2, (N2,), jnp.float32) * 0.05
    ref2 = x2 @ w2 + b2
    out2_f32 = jax.block_until_ready(my_linear(x2, w2, b2, use_bf16=False))
    assert jnp.allclose(out2_f32, ref2, atol=1e-3, rtol=1e-3), "tiled f32 mismatch"
    out2_bf16 = jax.block_until_ready(my_linear(x2, w2, b2))
    assert jnp.allclose(out2_bf16, ref2, atol=5e-2, rtol=5e-2), "tiled bf16 mismatch"

    print("KERNEL_OK")
</pallas_src>

<mosaic_0001>
module attributes {stable_mosaic.version = 11 : i64} {
  func.func @_linear_kernel_bias(%arg0: i32, %arg1: i32, %arg2: i32, %arg3: memref<16x32xbf16, #tpu.memory_space<vmem>>, %arg4: memref<32x128xbf16, #tpu.memory_space<vmem>>, %arg5: memref<1x128xf32, #tpu.memory_space<vmem>>, %arg6: memref<16x128xf32, #tpu.memory_space<vmem>>) attributes {dimension_semantics = [#tpu.dimension_semantics<parallel>, #tpu.dimension_semantics<parallel>, #tpu.dimension_semantics<arbitrary>], iteration_bounds = array<i64: 1, 1, 1>, scalar_prefetch = 0 : i64, scratch_operands = 0 : i64, tpu.core_type = #tpu.core_type<tc>, window_params = [{transform_indices = @transform_0, window_bounds = array<i64: 16, 32>}, {transform_indices = @transform_1, window_bounds = array<i64: 32, 128>}, {transform_indices = @transform_2, window_bounds = array<i64: 1, 128>}, {transform_indices = @transform_3, window_bounds = array<i64: 16, 128>}]} {
    %c0_i32 = arith.constant 0 : i32
    %0 = arith.cmpi eq, %arg2, %c0_i32 : i32
    %1 = arith.extui %0 : i1 to i32
    %c0_i32_0 = arith.constant 0 : i32
    %2 = arith.cmpi ne, %1, %c0_i32_0 : i32
    scf.if %2 {
      %c0_8 = arith.constant 0 : index
      %c0_9 = arith.constant 0 : index
      %9 = vector.load %arg5[%c0_8, %c0_9] : memref<1x128xf32, #tpu.memory_space<vmem>>, vector<1x128xf32>
      %10 = vector.shape_cast %9 : vector<1x128xf32> to vector<1x128xf32>
      %11 = vector.broadcast %10 : vector<1x128xf32> to vector<16x128xf32>
      %c0_10 = arith.constant 0 : index
      %c0_11 = arith.constant 0 : index
      %12 = vector.load %arg6[%c0_10, %c0_11] : memref<16x128xf32, #tpu.memory_space<vmem>>, vector<16x128xf32>
      tpu.vector_store %arg6[%c0_10, %c0_11], %11 {strides = array<i32>} : memref<16x128xf32, #tpu.memory_space<vmem>>, vector<16x128xf32>,
    } else {
    }
    %c0 = arith.constant 0 : index
    %c0_1 = arith.constant 0 : index
    %3 = vector.load %arg6[%c0, %c0_1] : memref<16x128xf32, #tpu.memory_space<vmem>>, vector<16x128xf32>
    %c0_2 = arith.constant 0 : index
    %c0_3 = arith.constant 0 : index
    %4 = vector.load %arg3[%c0_2, %c0_3] : memref<16x32xbf16, #tpu.memory_space<vmem>>, vector<16x32xbf16>
    %c0_4 = arith.constant 0 : index
    %c0_5 = arith.constant 0 : index
    %5 = vector.load %arg4[%c0_4, %c0_5] : memref<32x128xbf16, #tpu.memory_space<vmem>>, vector<32x128xbf16>
    %cst = arith.constant dense<0.000000e+00> : vector<16x128xf32>
    %6 = tpu.matmul %4, %5, %cst {dimension_numbers = #tpu.dot_dimension_numbers<[1], [0], [0], [1], [0, 0, 1, 1], [], []>} : vector<16x32xbf16>, vector<32x128xbf16>, vector<16x128xf32> -> vector<16x128xf32>
    %7 = arith.addf %3, %6 : vector<16x128xf32>
    %c0_6 = arith.constant 0 : index
    %c0_7 = arith.constant 0 : index
    %8 = vector.load %arg6[%c0_6, %c0_7] : memref<16x128xf32, #tpu.memory_space<vmem>>, vector<16x128xf32>
    tpu.vector_store %arg6[%c0_6, %c0_7], %7 {strides = array<i32>} : memref<16x128xf32, #tpu.memory_space<vmem>>, vector<16x128xf32>,
    return
  }
  func.func @transform_0(%arg0: i32, %arg1: i32, %arg2: i32) -> (i32, i32) {
    %c0_i32 = arith.constant 0 : i32
    return %arg0, %arg2 : i32, i32
  }
  func.func @transform_1(%arg0: i32, %arg1: i32, %arg2: i32) -> (i32, i32) {
    %c0_i32 = arith.constant 0 : i32
    return %arg2, %arg1 : i32, i32
  }
  func.func @transform_2(%arg0: i32, %arg1: i32, %arg2: i32) -> (i32, i32) {
    %c0_i32 = arith.constant 0 : i32
    %c0_i32_0 = arith.constant 0 : i32
    return %c0_i32, %arg1 : i32, i32
  }
  func.func @transform_3(%arg0: i32, %arg1: i32, %arg2: i32) -> (i32, i32) {
    %c0_i32 = arith.constant 0 : i32
    return %arg0, %arg1 : i32, i32
  }
}

</mosaic_0001>

<llo_original>
// kernel: my_linear.1
$region0: #{my_linear.1}
  #allocation0 [shape = 'u32[]', space=smem, size = 0x4, offset = 0x4, fixed_abs, tag = 'smem constant byte address 0x4 - core index']
  #allocation1 [shape = 'u32[144,128]{1,0:T(1,128)}', space=vmem, size = 0x12000, scoped, tag = 'internal scratch']
  %s0 = inlined_call_operand.hbm [shape: bf16[16,32], index: 0, kind: input, shape index: {}]
  %s1 = inlined_call_operand.hbm [shape: bf16[32,128], index: 1, kind: input, shape index: {}]
  %s2 = inlined_call_operand.hbm [shape: f32[1,128], index: 2, kind: input, shape index: {}]
  %s3 = inlined_call_operand.hbm [shape: f32[16,128], index: 3, kind: output, shape index: {}]
  %s4 = sld [smem:[#allocation0]]
  $region38: #{my_linear.1} parent=0
    _
  %s6 = ssub.s32 1, %s4
  %s7 = scalar_select 0, %s6, %s4
  $region1: #{my_linear.1} parent=0
    #allocation2 [shape = 'u8[4096]{0}', space=vmem, size = 0x1000, scoped, tag = 'input window, operand 0, single buffered']
    #allocation3 [shape = 's32[1]{0}', space=sflag, size = 0x4, scoped, tag = 'scoped memory for my_linear.1']
    #allocation4 [shape = 's32[1]{0}', space=sflag, size = 0x4, scoped, tag = 'scoped memory for my_linear.1']
    #allocation5 [shape = 'u8[8192]{0}', space=vmem, size = 0x2000, scoped, tag = 'input window, operand 1, single buffered']
    #allocation6 [shape = 's32[1]{0}', space=sflag, size = 0x4, scoped, tag = 'scoped memory for my_linear.1']
    #allocation7 [shape = 'u8[512]{0}', space=vmem, size = 0x400, scoped, tag = 'input window, operand 2, single buffered']
    #allocation8 [shape = 'u8[8192]{0}', space=vmem, size = 0x2000, scoped, tag = 'output window, operand 0, single buffered']
    %8 = vsyncpa [#allocation3], 0
    %9 = vsyncpa [#allocation6], 0
    %10 = vsyncpa [#allocation4], 0
    // Predicated region
    $region2: #{my_linear.1} parent=1 // pred_check
      _
    $region3: #{my_linear.1} parent=1 // pred_check_branch
      %12 = sbr.rel (0) target = $region5
    $region4: #{my_linear.1} parent=1 // pred_region
      %s14 = ssub.s32 128, 128
      %15 = vsyncadd [#allocation3], %s14
      %s16 = sshll.u32 [#allocation2], 4
      %s17 = int_to_ptr.vmem [resolvable:$true] %s16
      %22 = dma.hbm_to_vmem [thread:$0]  %s0, 128, %s17, [#allocation3], 64, 64, 4
    $region5: #{my_linear.1} parent=1 // pred_fallthru
      _
    // Predicated region
    $region6: #{my_linear.1} parent=1 // pred_check
      _
    $region7: #{my_linear.1} parent=1 // pred_check_branch
      %24 = sbr.rel (0) target = $region9
    $region8: #{my_linear.1} parent=1 // pred_region
      %s26 = ssub.s32 256, 256
      %27 = vsyncadd [#allocation6], %s26
      %s28 = sshll.u32 [#allocation5], 4
      %s29 = int_to_ptr.vmem [resolvable:$true] %s28
      %34 = dma.hbm_to_vmem [thread:$0]  %s1, 256, %s29, [#allocation6], 64, 64, 4
    $region9: #{my_linear.1} parent=1 // pred_fallthru
      _
    // Predicated region
    $region10: #{my_linear.1} parent=1 // pred_check
      _
    $region11: #{my_linear.1} parent=1 // pred_check_branch
      %36 = sbr.rel (0) target = $region13
    $region12: #{my_linear.1} parent=1 // pred_region
      %s38 = ssub.s32 16, 16
      %39 = vsyncadd [#allocation6], %s38
      %s41 = sshll.u32 [#allocation7], 4
      %s42 = int_to_ptr.vmem [resolvable:$true] %s41
      %44 = dma.hbm_to_vmem [thread:$0]  %s2, 16, %s42, [#allocation6]
    $region13: #{my_linear.1} parent=1 // pred_fallthru
      _
    // Predicated region
    $region14: #{my_linear.1} parent=1 // pred_check
      _
    $region15: #{my_linear.1} parent=1 // pred_check_branch
      %46 = sbr.rel (0) target = $region17
    $region16: #{my_linear.1} parent=1 // pred_region
      %47 = dma.done [#allocation3], 128
    $region17: #{my_linear.1} parent=1 // pred_fallthru
      _
    // Predicated region
    $region18: #{my_linear.1} parent=1 // pred_check
      _
    $region19: #{my_linear.1} parent=1 // pred_check_branch
      %49 = sbr.rel (0) target = $region21
    $region20: #{my_linear.1} parent=1 // pred_region
      %50 = dma.done [#allocation6], 256
    $region21: #{my_linear.1} parent=1 // pred_fallthru
      _
    // Predicated region
    $region22: #{my_linear.1} parent=1 // pred_check
      _
    $region23: #{my_linear.1} parent=1 // pred_check_branch
      %52 = sbr.rel (0) target = $region25
    $region24: #{my_linear.1} parent=1 // pred_region
      %53 = dma.done [#allocation6], 16
    $region25: #{my_linear.1} parent=1 // pred_fallthru
      _
    %p55 = scmp.eq.s32.totalorder 0, 0
    // Predicated region
    $region26: #{my_linear.1} parent=1 // pred_check
      %p56 = pneg %p55
    $region27: #{my_linear.1} parent=1 // pred_check_branch
      %58 = sbr.rel (%p56) target = $region29
    $region28: #{my_linear.1} parent=1 // pred_region
      %v59 = vld [vmem:[#allocation7] sm:$0x1]
      %v61 = vlaneseq
      %v62 = vshrl.u32 %v61, 7
      %v63 = vsub.s32 0, %v62
      %v64 = vrot.slane %v59, %v63
      %66 = vst [vmem:[#allocation8] sm:$0xff] %v64
      %67 = vst [vmem:[#allocation8 + $0x8] sm:$0xff] %v64
    $region29: #{my_linear.1} parent=1 // pred_fallthru
      _
    %v68 = vld [vmem:[#allocation8] sm:$0xff]
    %v69 = vld [vmem:[#allocation8 + $0x8] sm:$0xff]
    %v70 = vld [vmem:[#allocation2] sm:$0xf]
    %v71 = vld [vmem:[#allocation2 + $0x4] sm:$0xf]
    %v72 = vld [vmem:[#allocation5] sm:$0xf]
    %v73 = vld [vmem:[#allocation5 + $0x4] sm:$0xf]
    %v74 = vld [vmem:[#allocation5 + $0x8] sm:$0xf]
    %v75 = vld [vmem:[#allocation5 + $0xc] sm:$0xf]
    %v78 = vunpack.c.l.b16 %v70
    %v79 = vunpack.c.l.b16 %v71
    %v80 = vpack.c.b16 %v79, %v78
    %v85 = vunpack.c.l.b16 %v72
    %v86 = vunpack.c.l.b16 %v73
    %v87 = vunpack.c.l.b16 %v74
    %v88 = vunpack.c.l.b16 %v75
    %v89 = vpack.c.b16 %v86, %v85
    %v90 = vpack.c.b16 %v88, %v87
    %vm93 = vcmask 261120
    %v95 = vsel %vm93, %v80, 0
    %97 = vmatprep.subr.bf16.mxu0 0
    %98 = vmatpush1.bf16.msra.mxu0 %v89
    %99 = vmatprep.subr.bf16.mxu0 0
    %100 = vmatpush1.bf16.msra.mxu0 %v90
    %101 = vmatprep.subr.bf16.mxu0 0
    %102 = vmatpush1.bf16.msra.mxu0 0
    %103 = vmatprep.subr.bf16.mxu0 0
    %104 = vmatpush1.bf16.msra.mxu0 0
    %105 = vmatprep.subr.bf16.mxu0 0
    %106 = vmatpush1.bf16.msra.mxu0 0
    %107 = vmatprep.subr.bf16.mxu0 0
    %108 = vmatpush1.bf16.msra.mxu0 0
    %109 = vmatprep.subr.bf16.mxu0 0
    %110 = vmatpush1.bf16.msra.mxu0 0
    %111 = vmatprep.subr.bf16.mxu0 0
    %112 = vmatpush1.bf16.msra.mxu0 0
    %113 = vmatprep.subr.bf16.mxu0 0
    %114 = vmatpush1.bf16.msra.mxu0 0
    %115 = vmatprep.subr.bf16.mxu0 0
    %116 = vmatpush1.bf16.msra.mxu0 0
    %117 = vmatprep.subr.bf16.mxu0 0
    %118 = vmatpush1.bf16.msra.mxu0 0
    %119 = vmatprep.subr.bf16.mxu0 0
    %120 = vmatpush1.bf16.msra.mxu0 0
    %121 = vmatprep.subr.bf16.mxu0 0
    %122 = vmatpush1.bf16.msra.mxu0 0
    %123 = vmatprep.subr.bf16.mxu0 0
    %124 = vmatpush1.bf16.msra.mxu0 0
    %125 = vmatprep.subr.bf16.mxu0 0
    %126 = vmatpush1.bf16.msra.mxu0 0
    %127 = vmatprep.subr.bf16.mxu0 0
    %128 = vmatpush1.bf16.msra.mxu0 0
    %129 = vmatprep.mubr.bf16.mxu0 0
    %130 = vmatmul.mubr.bf16.gmra.mrb[0].mxu0 %v95
    %v131 = vpop.f32.mrb[0].mxu0
    %v132 = vadd.f32 0.0, %v131
    %v133 = vpop.f32.mrb[0].mxu0
    %v134 = vpop.f32.mrb[0].mxu0
    %v135 = vadd.f32 0.0, %v134
    %v136 = vpop.f32.mrb[0].mxu0
    %137 = vdwg.mxu0
    %v138 = vadd.f32 %v68, %v132
    %v139 = vadd.f32 %v69, %v135
    %140 = vst [vmem:[#allocation8] sm:$0xff] %v138
    %141 = vst [vmem:[#allocation8 + $0x8] sm:$0xff] %v139
    // Predicated region
    $region30: #{my_linear.1} parent=1 // pred_check
      _
    $region31: #{my_linear.1} parent=1 // pred_check_branch
      %143 = sbr.rel (0) target = $region33
    $region32: #{my_linear.1} parent=1 // pred_region
      %s145 = ssub.s32 256, 256
      %146 = vsyncadd [#allocation4], %s145
      %s147 = sshll.u32 [#allocation8], 4
      %s148 = int_to_ptr.vmem [resolvable:$true] %s147
      %153 = dma.vmem_to_hbm [thread:$0]  %s148, 256, %s3, [#allocation4], 128, 128, 8
    $region33: #{my_linear.1} parent=1 // pred_fallthru
      _
    // Predicated region
    $region34: #{my_linear.1} parent=1 // pred_check
      _
    $region35: #{my_linear.1} parent=1 // pred_check_branch
      %155 = sbr.rel (0) target = $region37
    $region36: #{my_linear.1} parent=1 // pred_region
      %156 = dma.done [#allocation4], 256
    $region37: #{my_linear.1} parent=1 // pred_fallthru
      _
    %157 = vsyncpa [#allocation3], 1
    %158 = vsyncpa [#allocation6], 1
    %159 = vsyncpa [#allocation4], 1

</llo_original>
